<compile_context>
chip_gen: v6e
topology: v6e:2x2x1
jax: 0.10.0
libtpu: 0.0.40
codegen_flags: <defaults>
</compile_context>

<pallas_src>
import functools

import jax
import jax.numpy as jnp
from jax.experimental import pallas as pl
from jax.experimental.pallas import tpu as pltpu


_TARGET_X_TILE_BYTES = 4 * 1024 * 1024    # ~4 MiB seq tile for x / out
_SMALL_FALLBACK_BYTES = 256 * 1024        # below this, plain XLA add is cheaper


def _round_up(n, m):
    return ((n + m - 1) // m) * m


def _pos_enc_kernel(x_ref, emb_ref, o_ref, *, batch):
    # x_ref:   (tl, B*D) tile of the flattened input
    # emb_ref: (tl, D)   matching tile of the positional table
    # out[l, b*D + d] = x[l, b*D + d] + emb[l, d]
    e = emb_ref[...]
    if batch > 1:
        # Broadcast the positional row across the batch along lanes.
        e = jnp.concatenate([e] * batch, axis=-1)
    o_ref[...] = x_ref[...] + e


def positional_encoding(x, emb_table, *, force_kernel=False):
    """x: (L, B, D); emb_table: (max_len, D) with max_len >= L. Returns (L, B, D)."""
    L, B, D = x.shape
    max_len, D_e = emb_table.shape
    if D_e != D:
        raise ValueError(f"hidden mismatch: x has D={D}, table has D={D_e}")
    if L > max_len:
        raise ValueError(f"sequence length {L} exceeds max_len {max_len}")

    # Cast the table once here (no-op when dtypes already match) instead of
    # converting per tile inside the kernel.
    emb = emb_table if emb_table.dtype == x.dtype else emb_table.astype(x.dtype)

    # Tiny-input fast path: kernel launch + DMA setup is pure overhead there.
    if (not force_kernel) and x.size * x.dtype.itemsize < _SMALL_FALLBACK_BYTES:
        return x + emb[:L][:, None, :]

    # Free, contiguous view: seq on sublanes, B*D on lanes (lane-dense stores).
    x2 = x.reshape(L, B * D)

    # Seq tile: as large as fits the per-buffer budget, multiple of 8, >= 8.
    row_bytes = B * D * x.dtype.itemsize
    tl_cap = max(8, (_TARGET_X_TILE_BYTES // max(1, row_bytes)) // 8 * 8)
    tl = int(min(_round_up(L, 8), tl_cap))
    grid = (pl.cdiv(L, tl),)

    # Explicit scoped-VMEM budget: double-buffered x/out/emb tiles plus the
    # in-kernel broadcast intermediate, clamped to be safe on v7x (64 MiB).
    x_tile_bytes = tl * B * D * x.dtype.itemsize
    e_tile_bytes = tl * D * emb.dtype.itemsize
    vmem_needed = 2 * (2 * x_tile_bytes + e_tile_bytes) + x_tile_bytes + (4 << 20)
    vmem_limit = int(min(56 << 20, max(32 << 20, vmem_needed)))

    out2 = pl.pallas_call(
        functools.partial(_pos_enc_kernel, batch=B),
        out_shape=jax.ShapeDtypeStruct((L, B * D), x.dtype),
        grid_spec=pltpu.PrefetchScalarGridSpec(
            num_scalar_prefetch=0,
            grid=grid,
            in_specs=[
                # x view: block over seq only; B*D stays whole (full lane dim).
                pl.BlockSpec((tl, B * D), lambda i: (i, 0)),
                # Full table passed directly; block i covers positions
                # [i*tl, (i+1)*tl) which are exactly arange(L) positions.
                pl.BlockSpec((tl, D), lambda i: (i, 0)),
            ],
            out_specs=pl.BlockSpec((tl, B * D), lambda i: (i, 0)),
        ),
        compiler_params=pltpu.CompilerParams(
            dimension_semantics=("parallel",),
            vmem_limit_bytes=vmem_limit,
        ),
    )(x2, emb)

    return out2.reshape(L, B, D)


if __name__ == "__main__":
    key = jax.random.PRNGKey(0)
    kx, ke, kx2, ke2 = jax.random.split(key, 4)

    MAX_LEN = 350

    # Small shapes consistent with the module: seq L=8, batch B=2, hidden D=32.
    L, B, D = 8, 2, 32
    x = jax.random.normal(kx, (L, B, D), dtype=jnp.float32)
    emb_table = jax.random.normal(ke, (MAX_LEN, D), dtype=jnp.float32) * 0.02

    out = positional_encoding(x, emb_table, force_kernel=True)
    out = jax.block_until_ready(out)
    ref = x + emb_table[:L][:, None, :]
    assert out.shape == (L, B, D)
    assert jnp.allclose(out, ref, atol=1e-6), "mismatch vs reference (small case)"

    # Larger case: exercises the big-seq-tile path and a ragged final block
    # (L not a multiple of the 8-row sublane granularity).
    L2, B2, D2 = 300, 4, 256
    x_big = jax.random.normal(kx2, (L2, B2, D2), dtype=jnp.float32)
    emb_table_big = jax.random.normal(ke2, (MAX_LEN, D2), dtype=jnp.float32) * 0.02
    out_big = jax.block_until_ready(positional_encoding(x_big, emb_table_big))
    ref_big = x_big + emb_table_big[:L2][:, None, :]
    assert out_big.shape == (L2, B2, D2)
    assert jnp.allclose(out_big, ref_big, atol=1e-6), "mismatch vs reference (large case)"

    print("KERNEL_OK")
</pallas_src>

<mosaic_0001>
module attributes {stable_mosaic.version = 11 : i64} {
  func.func @_pos_enc_kernel(%arg0: i32, %arg1: memref<8x64xf32, #tpu.memory_space<vmem>>, %arg2: memref<8x32xf32, #tpu.memory_space<vmem>>, %arg3: memref<8x64xf32, #tpu.memory_space<vmem>>) attributes {dimension_semantics = [#tpu.dimension_semantics<parallel>], iteration_bounds = array<i64: 1>, scalar_prefetch = 0 : i64, scratch_operands = 0 : i64, tpu.core_type = #tpu.core_type<tc>, window_params = [{transform_indices = @transform_0, window_bounds = array<i64: 8, 64>}, {transform_indices = @transform_1, window_bounds = array<i64: 8, 32>}, {transform_indices = @transform_2, window_bounds = array<i64: 8, 64>}]} {
    %c0 = arith.constant 0 : index
    %c0_0 = arith.constant 0 : index
    %0 = vector.load %arg2[%c0, %c0_0] : memref<8x32xf32, #tpu.memory_space<vmem>>, vector<8x32xf32>
    %1 = tpu.concatenate %0, %0 in 1 : vector<8x32xf32>, vector<8x32xf32> -> vector<8x64xf32>
    %c0_1 = arith.constant 0 : index
    %c0_2 = arith.constant 0 : index
    %2 = vector.load %arg1[%c0_1, %c0_2] : memref<8x64xf32, #tpu.memory_space<vmem>>, vector<8x64xf32>
    %3 = arith.addf %2, %1 : vector<8x64xf32>
    %c0_3 = arith.constant 0 : index
    %c0_4 = arith.constant 0 : index
    %4 = vector.load %arg3[%c0_3, %c0_4] : memref<8x64xf32, #tpu.memory_space<vmem>>, vector<8x64xf32>
    tpu.vector_store %arg3[%c0_3, %c0_4], %3 {strides = array<i32>} : memref<8x64xf32, #tpu.memory_space<vmem>>, vector<8x64xf32>,
    return
  }
  func.func @transform_0(%arg0: i32) -> (i32, i32) {
    %c0_i32 = arith.constant 0 : i32
    %c0_i32_0 = arith.constant 0 : i32
    return %arg0, %c0_i32 : i32, i32
  }
  func.func @transform_1(%arg0: i32) -> (i32, i32) {
    %c0_i32 = arith.constant 0 : i32
    %c0_i32_0 = arith.constant 0 : i32
    return %arg0, %c0_i32 : i32, i32
  }
  func.func @transform_2(%arg0: i32) -> (i32, i32) {
    %c0_i32 = arith.constant 0 : i32
    %c0_i32_0 = arith.constant 0 : i32
    return %arg0, %c0_i32 : i32, i32
  }
}

</mosaic_0001>

<llo_original>
// kernel: tpu_custom_call.1
$region0: #{tpu_custom_call.1}
  #allocation0 [shape = 'u32[]', space=smem, size = 0x4, offset = 0x4, fixed_abs, tag = 'smem constant byte address 0x4 - core index']
  #allocation1 [shape = 'u32[144,128]{1,0:T(1,128)}', space=vmem, size = 0x12000, scoped, tag = 'internal scratch']
  %s0 = inlined_call_operand.vmem [shape: f32[8,64], index: 0, kind: input, shape index: {}]
  %s1 = inlined_call_operand.vmem [shape: f32[350,32], index: 1, kind: input, shape index: {}]
  %s2 = inlined_call_operand.hbm [shape: f32[8,64], index: 2, kind: output, shape index: {}]
  %s3 = sld [smem:[#allocation0]]
  $region18: #{tpu_custom_call.1} parent=0
    _
  %s5 = ssub.s32 1, %s3
  %s6 = scalar_select 0, %s5, %s3
  $region1: #{tpu_custom_call.1} parent=0
    #allocation2 [shape = 'u8[4096]{0}', space=vmem, size = 0x1000, scoped, tag = 'output window, operand 0, single buffered']
    #allocation3 [shape = 's32[1]{0}', space=sflag, size = 0x4, scoped, tag = 'scoped memory for tpu_custom_call.1']
    %7 = vsyncpa [#allocation3], 0
    // Predicated region
    $region2: #{tpu_custom_call.1} parent=1 // pred_check
      _
    $region3: #{tpu_custom_call.1} parent=1 // pred_check_branch
      %9 = sbr.rel (0) target = $region5
    $region4: #{tpu_custom_call.1} parent=1 // pred_region
      _
    $region5: #{tpu_custom_call.1} parent=1 // pred_fallthru
      _
    // Predicated region
    $region6: #{tpu_custom_call.1} parent=1 // pred_check
      _
    $region7: #{tpu_custom_call.1} parent=1 // pred_check_branch
      %11 = sbr.rel (0) target = $region9
    $region8: #{tpu_custom_call.1} parent=1 // pred_region
      _
    $region9: #{tpu_custom_call.1} parent=1 // pred_fallthru
      _
    %v12 = vld [vmem:[%s1] sm:$0xff]
    %14 = vrot.lane.b32.xlu0 %v12, 32
    %v15 = vpop.permute.xlu0 %14
    %vm17 = vcmask 261120
    %v18 = vsel %vm17, %v12, %v15
    %v19 = vld [vmem:[%s0] sm:$0xff]
    %v20 = vadd.f32 %v19, %v18
    %vm21 = vcmask 523264
    %22 = vst.msk [vmem:[#allocation2] sm:$0xff] %vm21, %v20
    // Predicated region
    $region10: #{tpu_custom_call.1} parent=1 // pred_check
      _
    $region11: #{tpu_custom_call.1} parent=1 // pred_check_branch
      %24 = sbr.rel (0) target = $region13
    $region12: #{tpu_custom_call.1} parent=1 // pred_region
      %s26 = ssub.s32 128, 128
      %27 = vsyncadd [#allocation3], %s26
      %s29 = sshll.u32 [#allocation2], 4
      %s30 = int_to_ptr.vmem [resolvable:$true] %s29
      %32 = dma.vmem_to_hbm [thread:$0]  %s30, 128, %s2, [#allocation3]
    $region13: #{tpu_custom_call.1} parent=1 // pred_fallthru
      _
    // Predicated region
    $region14: #{tpu_custom_call.1} parent=1 // pred_check
      _
    $region15: #{tpu_custom_call.1} parent=1 // pred_check_branch
      %34 = sbr.rel (0) target = $region17
    $region16: #{tpu_custom_call.1} parent=1 // pred_region
      %35 = dma.done [#allocation3], 128
    $region17: #{tpu_custom_call.1} parent=1 // pred_fallthru
      _
    %36 = vsyncpa [#allocation3], 1

</llo_original>
